<compile_context>
chip_gen: v6e
topology: v6e:2x2x1
jax: 0.10.0
libtpu: 0.0.40
codegen_flags: <defaults>
</compile_context>

<pallas_src>
import functools

import jax
import jax.numpy as jnp
import numpy as np
from jax import lax
from jax.experimental import pallas as pl
from jax.experimental.pallas import tpu as pltpu


# ----------------------------- helpers ------------------------------------

def _round_up(n, k):
    return ((n + k - 1) // k) * k


def _pad2(a, rows, cols):
    return jnp.pad(a, ((0, rows - a.shape[0]), (0, cols - a.shape[1])))


# ----------------------------- Pallas kernel ------------------------------

def mon_fb_kernel(bias_ref, m_ref, o_ref, z_ref, *, alpha, tol, max_iter):
    f32 = jnp.float32
    z_ref[...] = jnp.zeros_like(z_ref)

    def one_step(z):
        # multiply(z)+bias collapsed into a single MXU matmul against M.
        zn = jnp.dot(z, m_ref[...], preferred_element_type=f32) + bias_ref[...]
        if alpha != 1.0:                       # static fold; no *1.0 / *0.0 emitted
            zn = (1.0 - alpha) * z + alpha * zn
        zn = jnp.maximum(zn, 0.0)              # MONReLU
        diff = zn - z
        err_sq = jnp.sum(diff * diff)
        # err > tol  <=>  err_sq > (tol * (1e-6 + ||zn||))^2  (both sides >= 0)
        thresh = tol * (1e-6 + jnp.sqrt(jnp.sum(zn * zn)))
        keep_going = err_sq > thresh * thresh
        return zn, keep_going

    def cond_fn(carry):
        _, keep = carry
        return keep

    def body_fn(carry):
        it, _ = carry
        z = z_ref[...]

        # Step 1 (cond_fn guarantees the reference loop would run it).
        zn1, k1 = one_step(z)
        it1 = it + 1
        keep1 = jnp.logical_and(k1, it1 < max_iter)

        # Step 2 — speculative: the matmul issues regardless, overlapping the
        # step-1 convergence reductions and scalar branch; its result is only
        # committed if step 1 did not terminate, so stopping is bit-identical.
        zn2, k2 = one_step(zn1)
        it2 = it1 + 1
        keep2 = jnp.logical_and(k2, it2 < max_iter)

        z_ref[...] = zn1

        @pl.when(keep1)
        def _():
            z_ref[...] = zn2

        it_out = jnp.where(keep1, it2, it1)
        return it_out, jnp.logical_and(keep1, keep2)

    lax.while_loop(cond_fn, body_fn,
                   (jnp.int32(0), jnp.asarray(max_iter > 0)))

    # Final step: out = relu(multiply(z) + bias) (no alpha mixing; the custom
    # autograd Backward is the identity in the forward pass).
    out = jnp.dot(z_ref[...], m_ref[...], preferred_element_type=f32) + bias_ref[...]
    o_ref[...] = jnp.maximum(out, 0.0).astype(o_ref.dtype)


def mon_forward_backward(x, U_W, U_b, A_W, B_W,
                         alpha=1.0, tol=1e-3, max_iter=50, m=1.0):
    f32 = jnp.float32
    batch, in_dim = x.shape
    out_dim = U_W.shape[0]

    # Lane-dense padding: dout -> multiple of 128, batch -> multiple of 8.
    bp = _round_up(batch, 8)
    dout_p = _round_up(out_dim, 128)

    # Collapse the four per-iteration matmuls of multiply() into one operator:
    #   multiply(z) = (1-m) z - (z A^T) A + z B^T - z B = z @ M
    A = A_W.astype(f32)
    B = B_W.astype(f32)
    M = (1.0 - m) * jnp.eye(out_dim, dtype=f32) - A.T @ A + (B.T - B)

    # One-shot bias GEMM hoisted out of the kernel: it's used exactly once, so
    # keeping x / U^T / U_b VMEM-resident for the whole solve was pure waste.
    # Padding the *result* leaves padded rows/cols exactly zero, so z stays
    # zero there and the GLOBAL convergence norms match the unpadded reference.
    bias = x.astype(f32) @ U_W.astype(f32).T + U_b.astype(f32)[None, :]

    bias_p = _pad2(bias, bp, dout_p)                  # (bp, dout_p)
    m_p = _pad2(M, dout_p, dout_p)                    # (dout_p, dout_p)

    # Resident set: bias + z scratch + output (bp x dout_p each) + M.
    resident = 4 * (3 * bp * dout_p + dout_p * dout_p)
    vmem_limit = int(min(64 * 1024 * 1024, 2 * resident + (8 << 20)))

    kernel = functools.partial(mon_fb_kernel, alpha=float(alpha), tol=float(tol),
                               max_iter=int(max_iter))
    vmem = pl.BlockSpec(memory_space=pltpu.MemorySpace.VMEM)
    out_p = pl.pallas_call(
        kernel,
        out_shape=jax.ShapeDtypeStruct((bp, dout_p), f32),
        in_specs=[vmem, vmem],
        out_specs=vmem,
        scratch_shapes=[pltpu.VMEM((bp, dout_p), f32)],   # z
        compiler_params=pltpu.CompilerParams(vmem_limit_bytes=vmem_limit),
    )(bias_p, m_p)
    return out_p[:batch, :out_dim].astype(x.dtype)


# --------------------------- pure-JAX reference ----------------------------

def mon_forward_backward_ref(x, U_W, U_b, A_W, B_W,
                             alpha=1.0, tol=1e-3, max_iter=50, m=1.0):
    x = x.astype(jnp.float32)
    bias = x @ U_W.T + U_b[None, :]

    def multiply(z):
        return (1.0 - m) * z - (z @ A_W.T) @ A_W + z @ B_W.T - z @ B_W

    z = jnp.zeros_like(bias)
    err, it = 1.0, 0
    while err > tol and it < max_iter:
        zn = jnp.maximum((1.0 - alpha) * z + alpha * (multiply(z) + bias), 0.0)
        err = float(jnp.linalg.norm(zn - z) / (1e-6 + jnp.linalg.norm(zn)))
        z = zn
        it += 1
    return jnp.maximum(multiply(z) + bias, 0.0)


# --------------------------------- main ------------------------------------

if __name__ == "__main__":
    batch, in_dim, out_dim = 8, 32, 64
    alpha, tol, max_iter, m = 1.0, 1e-3, 50, 1.0

    key = jax.random.PRNGKey(0)
    k_x, k_u, k_ub, k_a, k_b = jax.random.split(key, 5)

    # Deterministic, small-scale weights (keeps the fixed-point map contractive).
    x = jax.random.normal(k_x, (batch, in_dim), dtype=jnp.float32)
    U_W = 0.1 * jax.random.normal(k_u, (out_dim, in_dim), dtype=jnp.float32)
    U_b = 0.1 * jax.random.normal(k_ub, (out_dim,), dtype=jnp.float32)
    A_W = 0.02 * jax.random.normal(k_a, (out_dim, out_dim), dtype=jnp.float32)
    B_W = 0.02 * jax.random.normal(k_b, (out_dim, out_dim), dtype=jnp.float32)

    out = mon_forward_backward(x, U_W, U_b, A_W, B_W,
                               alpha=alpha, tol=tol, max_iter=max_iter, m=m)
    out = jax.block_until_ready(out)

    ref = mon_forward_backward_ref(x, U_W, U_b, A_W, B_W,
                                   alpha=alpha, tol=tol, max_iter=max_iter, m=m)

    assert out.shape == (batch, out_dim)
    assert bool(jnp.all(jnp.isfinite(out)))
    np.testing.assert_allclose(np.asarray(out), np.asarray(ref), rtol=2e-4, atol=1e-5)

    print("KERNEL_OK")
</pallas_src>

<mosaic_0001>
module attributes {stable_mosaic.version = 11 : i64} {
  func.func @mon_fb_kernel(%arg0: memref<8x128xf32, #tpu.memory_space<vmem>>, %arg1: memref<128x128xf32, #tpu.memory_space<vmem>>, %arg2: memref<8x128xf32, #tpu.memory_space<vmem>>, %arg3: memref<8x128xf32, #tpu.memory_space<vmem>>) attributes {dimension_semantics = [], scalar_prefetch = 0 : i64, scratch_operands = 1 : i64, tpu.core_type = #tpu.core_type<tc>} {
    %cst = arith.constant 0.000000e+00 : f32
    %0 = vector.broadcast %cst : f32 to vector<8x128xf32>
    %c0 = arith.constant 0 : index
    %c0_0 = arith.constant 0 : index
    %1 = vector.load %arg3[%c0, %c0_0] : memref<8x128xf32, #tpu.memory_space<vmem>>, vector<8x128xf32>
    tpu.vector_store %arg3[%c0, %c0_0], %0 {strides = array<i32>} : memref<8x128xf32, #tpu.memory_space<vmem>>, vector<8x128xf32>,
    %c0_i32 = arith.constant 0 : i32
    %true = arith.constant true
    %2:2 = scf.while (%arg4 = %c0_i32, %arg5 = %true) : (i32, i1) -> (i32, i1) {
      scf.condition(%arg5) %arg4, %arg5 : i32, i1
    } do {
    ^bb0(%arg4: i32, %arg5: i1):
      %c0_11 = arith.constant 0 : index
      %c0_12 = arith.constant 0 : index
      %11 = vector.load %arg3[%c0_11, %c0_12] : memref<8x128xf32, #tpu.memory_space<vmem>>, vector<8x128xf32>
      %c0_13 = arith.constant 0 : index
      %c0_14 = arith.constant 0 : index
      %12 = vector.load %arg1[%c0_13, %c0_14] : memref<128x128xf32, #tpu.memory_space<vmem>>, vector<128x128xf32>
      %cst_15 = arith.constant dense<0.000000e+00> : vector<8x128xf32>
      %13 = tpu.matmul %11, %12, %cst_15 {dimension_numbers = #tpu.dot_dimension_numbers<[1], [0], [0], [1], [0, 0, 1, 1], [], []>} : vector<8x128xf32>, vector<128x128xf32>, vector<8x128xf32> -> vector<8x128xf32>
      %c0_16 = arith.constant 0 : index
      %c0_17 = arith.constant 0 : index
      %14 = vector.load %arg0[%c0_16, %c0_17] : memref<8x128xf32, #tpu.memory_space<vmem>>, vector<8x128xf32>
      %15 = arith.addf %13, %14 : vector<8x128xf32>
      %cst_18 = arith.constant 0.000000e+00 : f32
      %16 = vector.broadcast %cst_18 : f32 to vector<8x128xf32>
      %17 = arith.maximumf %15, %16 : vector<8x128xf32>
      %18 = arith.subf %17, %11 : vector<8x128xf32>
      %19 = arith.mulf %18, %18 : vector<8x128xf32>
      %20 = vector.shape_cast %19 : vector<8x128xf32> to vector<1x8x128xf32>
      %cst_19 = arith.constant dense<0.000000e+00> : vector<1xf32>
      %21 = vector.multi_reduction <add>, %20, %cst_19 [1, 2] : vector<1x8x128xf32> to vector<1xf32>
      %22 = vector.shape_cast %21 : vector<1xf32> to vector<1x1x1xf32>
      %23 = vector.extract %22[0, 0, 0] : f32 from vector<1x1x1xf32>
      %24 = arith.mulf %17, %17 : vector<8x128xf32>
      %25 = vector.shape_cast %24 : vector<8x128xf32> to vector<1x8x128xf32>
      %cst_20 = arith.constant dense<0.000000e+00> : vector<1xf32>
      %26 = vector.multi_reduction <add>, %25, %cst_20 [1, 2] : vector<1x8x128xf32> to vector<1xf32>
      %27 = vector.shape_cast %26 : vector<1xf32> to vector<1x1x1xf32>
      %28 = vector.extract %27[0, 0, 0] : f32 from vector<1x1x1xf32>
      %29 = math.sqrt %28 : f32
      %cst_21 = arith.constant 9.99999997E-7 : f32
      %30 = arith.addf %cst_21, %29 : f32
      %cst_22 = arith.constant 1.000000e-03 : f32
      %31 = arith.mulf %cst_22, %30 : f32
      %32 = arith.mulf %31, %31 : f32
      %33 = arith.cmpf ogt, %23, %32 : f32
      %c1_i32 = arith.constant 1 : i32
      %34 = arith.addi %arg4, %c1_i32 : i32
      %c50_i32 = arith.constant 50 : i32
      %35 = arith.cmpi slt, %34, %c50_i32 : i32
      %36 = arith.andi %33, %35 : i1
      %c0_23 = arith.constant 0 : index
      %c0_24 = arith.constant 0 : index
      %37 = vector.load %arg1[%c0_23, %c0_24] : memref<128x128xf32, #tpu.memory_space<vmem>>, vector<128x128xf32>
      %cst_25 = arith.constant dense<0.000000e+00> : vector<8x128xf32>
      %38 = tpu.matmul %17, %37, %cst_25 {dimension_numbers = #tpu.dot_dimension_numbers<[1], [0], [0], [1], [0, 0, 1, 1], [], []>} : vector<8x128xf32>, vector<128x128xf32>, vector<8x128xf32> -> vector<8x128xf32>
      %c0_26 = arith.constant 0 : index
      %c0_27 = arith.constant 0 : index
      %39 = vector.load %arg0[%c0_26, %c0_27] : memref<8x128xf32, #tpu.memory_space<vmem>>, vector<8x128xf32>
      %40 = arith.addf %38, %39 : vector<8x128xf32>
      %cst_28 = arith.constant 0.000000e+00 : f32
      %41 = vector.broadcast %cst_28 : f32 to vector<8x128xf32>
      %42 = arith.maximumf %40, %41 : vector<8x128xf32>
      %43 = arith.subf %42, %17 : vector<8x128xf32>
      %44 = arith.mulf %43, %43 : vector<8x128xf32>
      %45 = vector.shape_cast %44 : vector<8x128xf32> to vector<1x8x128xf32>
      %cst_29 = arith.constant dense<0.000000e+00> : vector<1xf32>
      %46 = vector.multi_reduction <add>, %45, %cst_29 [1, 2] : vector<1x8x128xf32> to vector<1xf32>
      %47 = vector.shape_cast %46 : vector<1xf32> to vector<1x1x1xf32>
      %48 = vector.extract %47[0, 0, 0] : f32 from vector<1x1x1xf32>
      %49 = arith.mulf %42, %42 : vector<8x128xf32>
      %50 = vector.shape_cast %49 : vector<8x128xf32> to vector<1x8x128xf32>
      %cst_30 = arith.constant dense<0.000000e+00> : vector<1xf32>
      %51 = vector.multi_reduction <add>, %50, %cst_30 [1, 2] : vector<1x8x128xf32> to vector<1xf32>
      %52 = vector.shape_cast %51 : vector<1xf32> to vector<1x1x1xf32>
      %53 = vector.extract %52[0, 0, 0] : f32 from vector<1x1x1xf32>
      %54 = math.sqrt %53 : f32
      %cst_31 = arith.constant 9.99999997E-7 : f32
      %55 = arith.addf %cst_31, %54 : f32
      %cst_32 = arith.constant 1.000000e-03 : f32
      %56 = arith.mulf %cst_32, %55 : f32
      %57 = arith.mulf %56, %56 : f32
      %58 = arith.cmpf ogt, %48, %57 : f32
      %c1_i32_33 = arith.constant 1 : i32
      %59 = arith.addi %34, %c1_i32_33 : i32
      %c50_i32_34 = arith.constant 50 : i32
      %60 = arith.cmpi slt, %59, %c50_i32_34 : i32
      %61 = arith.andi %58, %60 : i1
      %c0_35 = arith.constant 0 : index
      %c0_36 = arith.constant 0 : index
      %62 = vector.load %arg3[%c0_35, %c0_36] : memref<8x128xf32, #tpu.memory_space<vmem>>, vector<8x128xf32>
      tpu.vector_store %arg3[%c0_35, %c0_36], %17 {strides = array<i32>} : memref<8x128xf32, #tpu.memory_space<vmem>>, vector<8x128xf32>,
      %63 = arith.extui %36 : i1 to i32
      %c0_i32_37 = arith.constant 0 : i32
      %64 = arith.cmpi ne, %63, %c0_i32_37 : i32
      scf.if %64 {
        %c0_38 = arith.constant 0 : index
        %c0_39 = arith.constant 0 : index
        %67 = vector.load %arg3[%c0_38, %c0_39] : memref<8x128xf32, #tpu.memory_space<vmem>>, vector<8x128xf32>
        tpu.vector_store %arg3[%c0_38, %c0_39], %42 {strides = array<i32>} : memref<8x128xf32, #tpu.memory_space<vmem>>, vector<8x128xf32>,
      } else {
      }
      %65 = arith.select %36, %59, %34 : i32
      %66 = arith.andi %36, %61 : i1
      scf.yield %65, %66 : i32, i1
    }
    %c0_1 = arith.constant 0 : index
    %c0_2 = arith.constant 0 : index
    %3 = vector.load %arg3[%c0_1, %c0_2] : memref<8x128xf32, #tpu.memory_space<vmem>>, vector<8x128xf32>
    %c0_3 = arith.constant 0 : index
    %c0_4 = arith.constant 0 : index
    %4 = vector.load %arg1[%c0_3, %c0_4] : memref<128x128xf32, #tpu.memory_space<vmem>>, vector<128x128xf32>
    %cst_5 = arith.constant dense<0.000000e+00> : vector<8x128xf32>
    %5 = tpu.matmul %3, %4, %cst_5 {dimension_numbers = #tpu.dot_dimension_numbers<[1], [0], [0], [1], [0, 0, 1, 1], [], []>} : vector<8x128xf32>, vector<128x128xf32>, vector<8x128xf32> -> vector<8x128xf32>
    %c0_6 = arith.constant 0 : index
    %c0_7 = arith.constant 0 : index
    %6 = vector.load %arg0[%c0_6, %c0_7] : memref<8x128xf32, #tpu.memory_space<vmem>>, vector<8x128xf32>
    %7 = arith.addf %5, %6 : vector<8x128xf32>
    %cst_8 = arith.constant 0.000000e+00 : f32
    %8 = vector.broadcast %cst_8 : f32 to vector<8x128xf32>
    %9 = arith.maximumf %7, %8 : vector<8x128xf32>
    %c0_9 = arith.constant 0 : index
    %c0_10 = arith.constant 0 : index
    %10 = vector.load %arg2[%c0_9, %c0_10] : memref<8x128xf32, #tpu.memory_space<vmem>>, vector<8x128xf32>
    tpu.vector_store %arg2[%c0_9, %c0_10], %9 {strides = array<i32>} : memref<8x128xf32, #tpu.memory_space<vmem>>, vector<8x128xf32>,
    return
  }
}

</mosaic_0001>

<llo_original>
// kernel: tpu_custom_call.1
$region0: #{tpu_custom_call.1}
  #allocation0 [shape = 'u32[]', space=smem, size = 0x4, offset = 0x4, fixed_abs, tag = 'smem constant byte address 0x4 - core index']
  #allocation1 [shape = 'u32[144,128]{1,0:T(1,128)}', space=vmem, size = 0x12000, scoped, tag = 'internal scratch']
  #allocation2 [shape = 'f32[8,128]{1,0:T(8,128)}', space=vmem, size = 0x1000, scoped, tag = 'scratch operand']
  %s0 = inlined_call_operand.hbm [shape: f32[8,128], index: 0, kind: input, shape index: {}]
  %s1 = inlined_call_operand.hbm [shape: f32[128,128], index: 1, kind: input, shape index: {}]
  %s2 = inlined_call_operand.hbm [shape: f32[8,128], index: 2, kind: output, shape index: {}]
  %s3 = sld [smem:[#allocation0]]
  $region37: #{tpu_custom_call.1} parent=0
    _
  %s5 = ssub.s32 1, %s3
  %s6 = scalar_select 0, %s5, %s3
  $region1: #{tpu_custom_call.1} parent=0
    #allocation3 [shape = 'u8[4096]{0}', space=vmem, size = 0x1000, scoped, tag = 'input window, operand 0, single buffered']
    #allocation4 [shape = 's32[1]{0}', space=sflag, size = 0x4, scoped, tag = 'scoped memory for tpu_custom_call.1']
    #allocation5 [shape = 's32[1]{0}', space=sflag, size = 0x4, scoped, tag = 'scoped memory for tpu_custom_call.1']
    #allocation6 [shape = 'u8[65536]{0}', space=vmem, size = 0x10000, scoped, tag = 'input window, operand 1, single buffered']
    #allocation7 [shape = 's32[1]{0}', space=sflag, size = 0x4, scoped, tag = 'scoped memory for tpu_custom_call.1']
    #allocation8 [shape = 'u8[4096]{0}', space=vmem, size = 0x1000, scoped, tag = 'output window, operand 0, single buffered']
    %7 = vsyncpa [#allocation4], 0
    %8 = vsyncpa [#allocation7], 0
    %9 = vsyncpa [#allocation5], 0
    // Predicated region
    $region2: #{tpu_custom_call.1} parent=1 // pred_check
      _
    $region3: #{tpu_custom_call.1} parent=1 // pred_check_branch
      %11 = sbr.rel (0) target = $region5
    $region4: #{tpu_custom_call.1} parent=1 // pred_region
      %s13 = ssub.s32 128, 128
      %14 = vsyncadd [#allocation4], %s13
      %s16 = sshll.u32 [#allocation3], 4
      %s17 = int_to_ptr.vmem [resolvable:$true] %s16
      %19 = dma.hbm_to_vmem [thread:$0]  %s0, 128, %s17, [#allocation4]
    $region5: #{tpu_custom_call.1} parent=1 // pred_fallthru
      _
    // Predicated region
    $region6: #{tpu_custom_call.1} parent=1 // pred_check
      _
    $region7: #{tpu_custom_call.1} parent=1 // pred_check_branch
      %21 = sbr.rel (0) target = $region9
    $region8: #{tpu_custom_call.1} parent=1 // pred_region
      %s23 = ssub.s32 2048, 2048
      %24 = vsyncadd [#allocation7], %s23
      %s25 = sshll.u32 [#allocation6], 4
      %s26 = int_to_ptr.vmem [resolvable:$true] %s25
      %31 = dma.hbm_to_vmem [thread:$0]  %s1, 2048, %s26, [#allocation7], 128, 128, 8
    $region9: #{tpu_custom_call.1} parent=1 // pred_fallthru
      _
    // Predicated region
    $region10: #{tpu_custom_call.1} parent=1 // pred_check
      _
    $region11: #{tpu_custom_call.1} parent=1 // pred_check_branch
      %33 = sbr.rel (0) target = $region13
    $region12: #{tpu_custom_call.1} parent=1 // pred_region
      %34 = dma.done [#allocation4], 128
    $region13: #{tpu_custom_call.1} parent=1 // pred_fallthru
      _
    // Predicated region
    $region14: #{tpu_custom_call.1} parent=1 // pred_check
      _
    $region15: #{tpu_custom_call.1} parent=1 // pred_check_branch
      %36 = sbr.rel (0) target = $region17
    $region16: #{tpu_custom_call.1} parent=1 // pred_region
      %37 = dma.done [#allocation7], 2048
    $region17: #{tpu_custom_call.1} parent=1 // pred_fallthru
      _
    %38 = vst [vmem:[#allocation2] sm:$0xff] 0.0
    // While loop
    $region18: #{tpu_custom_call.1} parent=1 // loop_pre_header
      _
    $region19: #{tpu_custom_call.1} parent=1 // loop_header
      %s40 = sphi 0, %s285
      %p41 = pphi 1, %p287
      %p42 = pneg %p41
    $region20: #{tpu_custom_call.1} parent=1 // loop_header_branch
      %44 = sbr.rel (%p42) target = $region24
    $region21: #{tpu_custom_call.1} parent=1 // loop_body
      %v45 = vld [vmem:[#allocation2] sm:$0xff]
      %v46 = vld [vmem:[#allocation6] sm:$0xff]
      %v47 = vld [vmem:[#allocation6 + $0x8] sm:$0xff]
      %v48 = vld [vmem:[#allocation6 + $0x10] sm:$0xff]
      %v49 = vld [vmem:[#allocation6 + $0x18] sm:$0xff]
      %v50 = vld [vmem:[#allocation6 + $0x20] sm:$0xff]
      %v51 = vld [vmem:[#allocation6 + $0x28] sm:$0xff]
      %v52 = vld [vmem:[#allocation6 + $0x30] sm:$0xff]
      %v53 = vld [vmem:[#allocation6 + $0x38] sm:$0xff]
      %v54 = vld [vmem:[#allocation6 + $0x40] sm:$0xff]
      %v55 = vld [vmem:[#allocation6 + $0x48] sm:$0xff]
      %v56 = vld [vmem:[#allocation6 + $0x50] sm:$0xff]
      %v57 = vld [vmem:[#allocation6 + $0x58] sm:$0xff]
      %v58 = vld [vmem:[#allocation6 + $0x60] sm:$0xff]
      %v59 = vld [vmem:[#allocation6 + $0x68] sm:$0xff]
      %v60 = vld [vmem:[#allocation6 + $0x70] sm:$0xff]
      %v61 = vld [vmem:[#allocation6 + $0x78] sm:$0xff]
      %v62 = vld [vmem:[#allocation3] sm:$0xff]
      %63 = vmatprep.subr.mxu0 0.0
      %64 = vmatpush1.msra.mxu0 %v61
      %65 = vmatprep.subr.mxu0 0.0
      %66 = vmatpush1.msra.mxu0 %v60
      %67 = vmatprep.subr.mxu0 0.0
      %68 = vmatpush1.msra.mxu0 %v59
      %69 = vmatprep.subr.mxu0 0.0
      %70 = vmatpush1.msra.mxu0 %v58
      %71 = vmatprep.subr.mxu0 0.0
      %72 = vmatpush1.msra.mxu0 %v57
      %73 = vmatprep.subr.mxu0 0.0
      %74 = vmatpush1.msra.mxu0 %v56
      %75 = vmatprep.subr.mxu0 0.0
      %76 = vmatpush1.msra.mxu0 %v55
      %77 = vmatprep.subr.mxu0 0.0
      %78 = vmatpush1.msra.mxu0 %v54
      %79 = vmatprep.subr.mxu0 0.0
      %80 = vmatpush1.msra.mxu0 %v53
      %81 = vmatprep.subr.mxu0 0.0
      %82 = vmatpush1.msra.mxu0 %v52
      %83 = vmatprep.subr.mxu0 0.0
      %84 = vmatpush1.msra.mxu0 %v51
      %85 = vmatprep.subr.mxu0 0.0
      %86 = vmatpush1.msra.mxu0 %v50
      %87 = vmatprep.subr.mxu0 0.0
      %88 = vmatpush1.msra.mxu0 %v49
      %89 = vmatprep.subr.mxu0 0.0
      %90 = vmatpush1.msra.mxu0 %v48
      %91 = vmatprep.subr.mxu0 0.0
      %92 = vmatpush1.msra.mxu0 %v47
      %93 = vmatprep.subr.mxu0 0.0
      %94 = vmatpush1.msra.mxu0 %v46
      %95 = vmatprep.subr.mxu0 0.0
      %96 = vmatpush2.msra.mxu0 0.0
      %97 = vmatprep.subr.mxu0 0.0
      %98 = vmatpush2.msra.mxu0 0.0
      %99 = vmatprep.subr.mxu0 0.0
      %100 = vmatpush2.msra.mxu0 0.0
      %101 = vmatprep.subr.mxu0 0.0
      %102 = vmatpush2.msra.mxu0 0.0
      %103 = vmatprep.subr.mxu0 0.0
      %104 = vmatpush2.msra.mxu0 0.0
      %105 = vmatprep.subr.mxu0 0.0
      %106 = vmatpush2.msra.mxu0 0.0
      %107 = vmatprep.subr.mxu0 0.0
      %108 = vmatpush2.msra.mxu0 0.0
      %109 = vmatprep.subr.mxu0 0.0
      %110 = vmatpush2.msra.mxu0 0.0
      %111 = vmatprep.subr.mxu0 0.0
      %112 = vmatpush2.msra.mxu0 0.0
      %113 = vmatprep.subr.mxu0 0.0
      %114 = vmatpush2.msra.mxu0 0.0
      %115 = vmatprep.subr.mxu0 0.0
      %116 = vmatpush2.msra.mxu0 0.0
      %117 = vmatprep.subr.mxu0 0.0
      %118 = vmatpush2.msra.mxu0 0.0
      %119 = vmatprep.subr.mxu0 0.0
      %120 = vmatpush2.msra.mxu0 0.0
      %121 = vmatprep.subr.mxu0 0.0
      %122 = vmatpush2.msra.mxu0 0.0
      %123 = vmatprep.subr.mxu0 0.0
      %124 = vmatpush2.msra.mxu0 0.0
      %125 = vmatprep.subr.mxu0 0.0
      %126 = vmatpush2.msra.mxu0 0.0
      %127 = vmatprep.mubr.f32.mxu0 0.0
      %128 = vmatmul.mubr.f32.gmra.mxu0 %v45
      %v129 = vpop.f32.mrf.mxu0
      %v130 = vadd.f32 %v62, %v129
      %v131 = vpop.f32.mrf.mxu0
      %132 = vdwg.mxu0
      %v133 = vmax.f32 %v130, 0.0
      %v134 = vsub.f32 %v133, %v45
      %v135 = vmul.f32 %v134, %v134
      %136 = vadd.xlane.f32.xlu0 %v135
      %v137 = vpop.xlane.xlu0 %136
      %v138 = vrot.slane %v137, 4
      %v139 = vadd.f32 %v137, %v138
      %v140 = vrot.slane %v139, 2
      %v141 = vadd.f32 %v139, %v140
      %v142 = vrot.slane %v141, 1
      %v143 = vadd.f32 %v141, %v142
      %s144 = vtos %v143
      %v145 = vmul.f32 %v133, %v133
      %146 = vadd.xlane.f32.xlu0 %v145
      %v147 = vpop.xlane.xlu0 %146
      %v148 = vrot.slane %v147, 4
      %v149 = vadd.f32 %v147, %v148
      %v150 = vrot.slane %v149, 2
      %v151 = vadd.f32 %v149, %v150
      %v152 = vrot.slane %v151, 1
      %v153 = vadd.f32 %v151, %v152
      %s154 = vtos %v153
      %v155 = vstv %s154
      %v156 = vrsqrt.pop %v155
      %v157 = vmul.f32 %v155, %v156
      %vm158 = vcmp.eq.f32.partialorder %v155, inf
      %v159 = vsel %vm158, %v155, %v157
      %vm160 = vcmp.eq.f32.partialorder %v155, 0.0
      %v161 = vand.u32 %v155, 2147483648
      %v162 = vsel %vm160, %v161, %v159
      %s163 = vtos %v162
      %s164 = sadd.f32 %s163, 1e-06
      %s165 = smul.f32 %s164, 0.001
      %s166 = smul.f32 %s165, %s165
      %p167 = scmp.gt.f32.partialorder %s144, %s166
      %s168 = sadd.s32 %s40, 1
      %p169 = scmp.lt.s32.totalorder %s168, 50
      %p170 = pnand %p167, %p169
      %p171 = pneg %p170
      %172 = vmatprep.subr.mxu0 0.0
      %173 = vmatpush1.msra.mxu0 %v61
      %174 = vmatprep.subr.mxu0 0.0
      %175 = vmatpush1.msra.mxu0 %v60
      %176 = vmatprep.subr.mxu0 0.0
      %177 = vmatpush1.msra.mxu0 %v59
      %178 = vmatprep.subr.mxu0 0.0
      %179 = vmatpush1.msra.mxu0 %v58
      %180 = vmatprep.subr.mxu0 0.0
      %181 = vmatpush1.msra.mxu0 %v57
      %182 = vmatprep.subr.mxu0 0.0
      %183 = vmatpush1.msra.mxu0 %v56
      %184 = vmatprep.subr.mxu0 0.0
      %185 = vmatpush1.msra.mxu0 %v55
      %186 = vmatprep.subr.mxu0 0.0
      %187 = vmatpush1.msra.mxu0 %v54
      %188 = vmatprep.subr.mxu0 0.0
      %189 = vmatpush1.msra.mxu0 %v53
      %190 = vmatprep.subr.mxu0 0.0
      %191 = vmatpush1.msra.mxu0 %v52
      %192 = vmatprep.subr.mxu0 0.0
      %193 = vmatpush1.msra.mxu0 %v51
      %194 = vmatprep.subr.mxu0 0.0
      %195 = vmatpush1.msra.mxu0 %v50
      %196 = vmatprep.subr.mxu0 0.0
      %197 = vmatpush1.msra.mxu0 %v49
      %198 = vmatprep.subr.mxu0 0.0
      %199 = vmatpush1.msra.mxu0 %v48
      %200 = vmatprep.subr.mxu0 0.0
      %201 = vmatpush1.msra.mxu0 %v47
      %202 = vmatprep.subr.mxu0 0.0
      %203 = vmatpush1.msra.mxu0 %v46
      %204 = vmatprep.subr.mxu0 0.0
      %205 = vmatpush2.msra.mxu0 0.0
      %206 = vmatprep.subr.mxu0 0.0
      %207 = vmatpush2.msra.mxu0 0.0
      %208 = vmatprep.subr.mxu0 0.0
      %209 = vmatpush2.msra.mxu0 0.0
      %210 = vmatprep.subr.mxu0 0.0
      %211 = vmatpush2.msra.mxu0 0.0
      %212 = vmatprep.subr.mxu0 0.0
      %213 = vmatpush2.msra.mxu0 0.0
      %214 = vmatprep.subr.mxu0 0.0
      %215 = vmatpush2.msra.mxu0 0.0
      %216 = vmatprep.subr.mxu0 0.0
      %217 = vmatpush2.msra.mxu0 0.0
      %218 = vmatprep.subr.mxu0 0.0
      %219 = vmatpush2.msra.mxu0 0.0
      %220 = vmatprep.subr.mxu0 0.0
      %221 = vmatpush2.msra.mxu0 0.0
      %222 = vmatprep.subr.mxu0 0.0
      %223 = vmatpush2.msra.mxu0 0.0
      %224 = vmatprep.subr.mxu0 0.0
      %225 = vmatpush2.msra.mxu0 0.0
      %226 = vmatprep.subr.mxu0 0.0
      %227 = vmatpush2.msra.mxu0 0.0
      %228 = vmatprep.subr.mxu0 0.0
      %229 = vmatpush2.msra.mxu0 0.0
      %230 = vmatprep.subr.mxu0 0.0
      %231 = vmatpush2.msra.mxu0 0.0
      %232 = vmatprep.subr.mxu0 0.0
      %233 = vmatpush2.msra.mxu0 0.0
      %234 = vmatprep.subr.mxu0 0.0
      %235 = vmatpush2.msra.mxu0 0.0
      %236 = vmatprep.mubr.f32.mxu0 0.0
      %237 = vmatmul.mubr.f32.gmra.mxu0 %v133
      %v238 = vpop.f32.mrf.mxu0
      %v239 = vadd.f32 %v62, %v238
      %v240 = vpop.f32.mrf.mxu0
      %241 = vdwg.mxu0
      %v242 = vmax.f32 %v239, 0.0
      %v243 = vsub.f32 %v242, %v133
      %v244 = vmul.f32 %v243, %v243
      %245 = vadd.xlane.f32.xlu0 %v244
      %v246 = vpop.xlane.xlu0 %245
      %v247 = vrot.slane %v246, 4
      %v248 = vadd.f32 %v246, %v247
      %v249 = vrot.slane %v248, 2
      %v250 = vadd.f32 %v248, %v249
      %v251 = vrot.slane %v250, 1
      %v252 = vadd.f32 %v250, %v251
      %s253 = vtos %v252
      %v254 = vmul.f32 %v242, %v242
      %255 = vadd.xlane.f32.xlu0 %v254
      %v256 = vpop.xlane.xlu0 %255
      %v257 = vrot.slane %v256, 4
      %v258 = vadd.f32 %v256, %v257
      %v259 = vrot.slane %v258, 2
      %v260 = vadd.f32 %v258, %v259
      %v261 = vrot.slane %v260, 1
      %v262 = vadd.f32 %v260, %v261
      %s263 = vtos %v262
      %v264 = vstv %s263
      %v265 = vrsqrt.pop %v264
      %v266 = vmul.f32 %v264, %v265
      %vm267 = vcmp.eq.f32.partialorder %v264, inf
      %v268 = vsel %vm267, %v264, %v266
      %vm269 = vcmp.eq.f32.partialorder %v264, 0.0
      %v270 = vand.u32 %v264, 2147483648
      %v271 = vsel %vm269, %v270, %v268
      %s272 = vtos %v271
      %s273 = sadd.f32 %s272, 1e-06
      %s274 = smul.f32 %s273, 0.001
      %s275 = smul.f32 %s274, %s274
      %p276 = scmp.gt.f32.partialorder %s253, %s275
      %s277 = sadd.s32 %s40, 2
      %p278 = scmp.lt.s32.totalorder %s277, 50
      %p279 = pnand %p276, %p278
      %p280 = pneg %p279
      %281 = vst [vmem:[#allocation2] sm:$0xff] %v133
      // Predicated region
      $region25: #{tpu_custom_call.1} parent=21 // pred_check
        _
      $region26: #{tpu_custom_call.1} parent=21 // pred_check_branch
        %283 = sbr.rel (%p170) target = $region28
      $region27: #{tpu_custom_call.1} parent=21 // pred_region
        %284 = vst [vmem:[#allocation2] sm:$0xff] %v242
      $region28: #{tpu_custom_call.1} parent=21 // pred_fallthru
        _
      %s285 = scalar_select %p171, %s277, %s168
      %p286 = pnand %p171, %p280
      %p287 = pneg %p286
    $region22: #{tpu_custom_call.1} parent=1 // loop_footer
      _
    $region23: #{tpu_custom_call.1} parent=1 // loop_footer_branch
      %39 = sbr.rel target = $region19
    $region24: #{tpu_custom_call.1} parent=1 // loop_exit
      _
    %v288 = vld [vmem:[#allocation2] sm:$0xff]
    %v289 = vld [vmem:[#allocation6] sm:$0xff]
    %v290 = vld [vmem:[#allocation6 + $0x8] sm:$0xff]
    %v291 = vld [vmem:[#allocation6 + $0x10] sm:$0xff]
    %v292 = vld [vmem:[#allocation6 + $0x18] sm:$0xff]
    %v293 = vld [vmem:[#allocation6 + $0x20] sm:$0xff]
    %v294 = vld [vmem:[#allocation6 + $0x28] sm:$0xff]
    %v295 = vld [vmem:[#allocation6 + $0x30] sm:$0xff]
    %v296 = vld [vmem:[#allocation6 + $0x38] sm:$0xff]
    %v297 = vld [vmem:[#allocation6 + $0x40] sm:$0xff]
    %v298 = vld [vmem:[#allocation6 + $0x48] sm:$0xff]
    %v299 = vld [vmem:[#allocation6 + $0x50] sm:$0xff]
    %v300 = vld [vmem:[#allocation6 + $0x58] sm:$0xff]
    %v301 = vld [vmem:[#allocation6 + $0x60] sm:$0xff]
    %v302 = vld [vmem:[#allocation6 + $0x68] sm:$0xff]
    %v303 = vld [vmem:[#allocation6 + $0x70] sm:$0xff]
    %v304 = vld [vmem:[#allocation6 + $0x78] sm:$0xff]
    %v305 = vld [vmem:[#allocation3] sm:$0xff]
    %306 = vmatprep.subr.mxu0 0.0
    %307 = vmatpush1.msra.mxu0 %v304
    %308 = vmatprep.subr.mxu0 0.0
    %309 = vmatpush1.msra.mxu0 %v303
    %310 = vmatprep.subr.mxu0 0.0
    %311 = vmatpush1.msra.mxu0 %v302
    %312 = vmatprep.subr.mxu0 0.0
    %313 = vmatpush1.msra.mxu0 %v301
    %314 = vmatprep.subr.mxu0 0.0
    %315 = vmatpush1.msra.mxu0 %v300
    %316 = vmatprep.subr.mxu0 0.0
    %317 = vmatpush1.msra.mxu0 %v299
    %318 = vmatprep.subr.mxu0 0.0
    %319 = vmatpush1.msra.mxu0 %v298
    %320 = vmatprep.subr.mxu0 0.0
    %321 = vmatpush1.msra.mxu0 %v297
    %322 = vmatprep.subr.mxu0 0.0
    %323 = vmatpush1.msra.mxu0 %v296
    %324 = vmatprep.subr.mxu0 0.0
    %325 = vmatpush1.msra.mxu0 %v295
    %326 = vmatprep.subr.mxu0 0.0
    %327 = vmatpush1.msra.mxu0 %v294
    %328 = vmatprep.subr.mxu0 0.0
    %329 = vmatpush1.msra.mxu0 %v293
    %330 = vmatprep.subr.mxu0 0.0
    %331 = vmatpush1.msra.mxu0 %v292
    %332 = vmatprep.subr.mxu0 0.0
    %333 = vmatpush1.msra.mxu0 %v291
    %334 = vmatprep.subr.mxu0 0.0
    %335 = vmatpush1.msra.mxu0 %v290
    %336 = vmatprep.subr.mxu0 0.0
    %337 = vmatpush1.msra.mxu0 %v289
    %338 = vmatprep.subr.mxu0 0.0
    %339 = vmatpush2.msra.mxu0 0.0
    %340 = vmatprep.subr.mxu0 0.0
    %341 = vmatpush2.msra.mxu0 0.0
    %342 = vmatprep.subr.mxu0 0.0
    %343 = vmatpush2.msra.mxu0 0.0
    %344 = vmatprep.subr.mxu0 0.0
    %345 = vmatpush2.msra.mxu0 0.0
    %346 = vmatprep.subr.mxu0 0.0
    %347 = vmatpush2.msra.mxu0 0.0
    %348 = vmatprep.subr.mxu0 0.0
    %349 = vmatpush2.msra.mxu0 0.0
    %350 = vmatprep.subr.mxu0 0.0
    %351 = vmatpush2.msra.mxu0 0.0
    %352 = vmatprep.subr.mxu0 0.0
    %353 = vmatpush2.msra.mxu0 0.0
    %354 = vmatprep.subr.mxu0 0.0
    %355 = vmatpush2.msra.mxu0 0.0
    %356 = vmatprep.subr.mxu0 0.0
    %357 = vmatpush2.msra.mxu0 0.0
    %358 = vmatprep.subr.mxu0 0.0
    %359 = vmatpush2.msra.mxu0 0.0
    %360 = vmatprep.subr.mxu0 0.0
    %361 = vmatpush2.msra.mxu0 0.0
    %362 = vmatprep.subr.mxu0 0.0
    %363 = vmatpush2.msra.mxu0 0.0
    %364 = vmatprep.subr.mxu0 0.0
    %365 = vmatpush2.msra.mxu0 0.0
    %366 = vmatprep.subr.mxu0 0.0
    %367 = vmatpush2.msra.mxu0 0.0
    %368 = vmatprep.subr.mxu0 0.0
    %369 = vmatpush2.msra.mxu0 0.0
    %370 = vmatprep.mubr.f32.mxu0 0.0
    %371 = vmatmul.mubr.f32.gmra.mxu0 %v288
    %v372 = vpop.f32.mrf.mxu0
    %v373 = vadd.f32 %v305, %v372
    %v374 = vpop.f32.mrf.mxu0
    %375 = vdwg.mxu0
    %v376 = vmax.f32 %v373, 0.0
    %377 = vst [vmem:[#allocation8] sm:$0xff] %v376
    // Predicated region
    $region29: #{tpu_custom_call.1} parent=1 // pred_check
      _
    $region30: #{tpu_custom_call.1} parent=1 // pred_check_branch
      %379 = sbr.rel (0) target = $region32
    $region31: #{tpu_custom_call.1} parent=1 // pred_region
      %s381 = ssub.s32 128, 128
      %382 = vsyncadd [#allocation5], %s381
      %s384 = sshll.u32 [#allocation8], 4
      %s385 = int_to_ptr.vmem [resolvable:$true] %s384
      %387 = dma.vmem_to_hbm [thread:$0]  %s385, 128, %s2, [#allocation5]
    $region32: #{tpu_custom_call.1} parent=1 // pred_fallthru
      _
    // Predicated region
    $region33: #{tpu_custom_call.1} parent=1 // pred_check
      _
    $region34: #{tpu_custom_call.1} parent=1 // pred_check_branch
      %389 = sbr.rel (0) target = $region36
    $region35: #{tpu_custom_call.1} parent=1 // pred_region
      %390 = dma.done [#allocation5], 128
    $region36: #{tpu_custom_call.1} parent=1 // pred_fallthru
      _
    %391 = vsyncpa [#allocation4], 1
    %392 = vsyncpa [#allocation7], 1
    %393 = vsyncpa [#allocation5], 1

</llo_original>
